<compile_context>
chip_gen: v7x
topology: tpu7x:2x2x1
jax: 0.10.0
libtpu: 0.0.40
codegen_flags: <defaults>
</compile_context>

<pallas_src>
import functools

import jax
import jax.numpy as jnp
from jax.experimental import pallas as pl
from jax.experimental.pallas import tpu as pltpu


def _copy_kernel(x_ref, o_ref):
    # Identity copy of the current lane-dense tile (VMEM -> VMEM).
    o_ref[...] = x_ref[...]


def _resolve_shape(numel, shape):
    """Resolve a torch.view-style shape (may contain a single -1)."""
    shape = list(shape)
    if -1 in shape:
        idx = shape.index(-1)
        known = 1
        for i, s in enumerate(shape):
            if i != idx:
                known *= int(s)
        assert known != 0 and numel % known == 0, "view shape incompatible"
        shape[idx] = numel // known
    total = 1
    for s in shape:
        total *= int(s)
    assert total == numel, "view shape incompatible with input numel"
    return tuple(int(s) for s in shape)


_TILE_BYTES_CAP = 4 << 20  # max bytes per block (per buffer)


def _sublane_multiple(itemsize):
    # f32/int32 -> 8, bf16/f16 -> 16, int8/fp8 -> 32 (sub-32-bit sublane packing).
    return max(8, 32 // int(itemsize))


def _choose_layout(numel, sub):
    """Pick (lanes, pad) so the (padded) buffer reshapes to (rows, lanes) with
    rows % sub == 0 and lanes a multiple of 128 (lane-dense, unmasked vst)."""
    for lanes in (2048, 1024, 512, 256, 128):
        if numel % lanes == 0 and (numel // lanes) % sub == 0:
            return lanes, 0
    lanes = 512
    chunk = sub * lanes
    pad = (-numel) % chunk
    return lanes, pad


def _choose_tile_rows(rows, lanes, itemsize, sub):
    """Largest tile_rows that is a multiple of `sub`, divides rows, and keeps
    the block under _TILE_BYTES_CAP.  Prefers >= 2 grid steps (v7x: 2 TCs)."""
    max_tile_rows = max(sub, (_TILE_BYTES_CAP // (lanes * itemsize)) // sub * sub)
    cand = min(rows, max_tile_rows)
    cand -= cand % sub
    tile_rows = sub
    while cand >= sub:
        if rows % cand == 0:
            tile_rows = cand
            break
        cand -= sub
    # If the whole slab fit in one block, split it so both v7x TensorCores
    # participate (measured-neutral on single-TC v5e/v6e).
    if rows // tile_rows == 1 and tile_rows % (2 * sub) == 0:
        tile_rows //= 2
    return tile_rows


def _pallas_copy_2d(flat2d, tile_rows, alias_input):
    rows, lanes = flat2d.shape
    itemsize = flat2d.dtype.itemsize
    tile_bytes = tile_rows * lanes * itemsize
    # in + out blocks, double-buffered -> ~4x block bytes, plus headroom.
    # Cap at 32 MiB so we never exceed v7x's 64 MiB physical VMEM.
    vmem_limit = int(min(32 << 20, max(4 * tile_bytes + (4 << 20), 8 << 20)))
    kwargs = dict(
        out_shape=jax.ShapeDtypeStruct((rows, lanes), flat2d.dtype),
        grid=(rows // tile_rows,),
        in_specs=[pl.BlockSpec((tile_rows, lanes), lambda i: (i, 0))],
        out_specs=pl.BlockSpec((tile_rows, lanes), lambda i: (i, 0)),
        compiler_params=pltpu.CompilerParams(
            dimension_semantics=("parallel",),
            vmem_limit_bytes=vmem_limit,
        ),
    )
    if alias_input:
        # Operand is a freshly materialized padded temp -> aliasing is free and
        # avoids allocating a second HBM buffer for the output.
        kwargs["input_output_aliases"] = {0: 0}
    return pl.pallas_call(_copy_kernel, **kwargs)(flat2d)


@functools.partial(jax.jit, static_argnames=("out_shape", "force_copy"))
def _view_impl(x, *, out_shape, force_copy):
    if not force_copy:
        # Recommended production path: a view of a contiguous buffer is pure
        # metadata in XLA (0 bytes of HBM traffic).
        return x.reshape(out_shape)

    flat = x.reshape(-1)
    numel = flat.shape[0]
    itemsize = flat.dtype.itemsize
    sub = _sublane_multiple(itemsize)
    lanes, pad = _choose_layout(numel, sub)
    if pad:
        flat = jnp.pad(flat, (0, pad))
    rows = (numel + pad) // lanes
    tile_rows = _choose_tile_rows(rows, lanes, itemsize, sub)

    out2d = _pallas_copy_2d(flat.reshape(rows, lanes), tile_rows,
                            alias_input=bool(pad))
    out_flat = out2d.reshape(-1)
    if pad:
        out_flat = out_flat[:numel]
    return out_flat.reshape(out_shape)


class View:
    """JAX/Pallas equivalent of the PyTorch `View` module.

    force_copy=True (default) routes the bytes through the Pallas identity-copy
    kernel; force_copy=False is the zero-cost metadata reshape.
    """

    def __init__(self, shape, *, force_copy=True):
        self.shape = tuple(shape)
        self.force_copy = force_copy

    def __call__(self, x):
        out_shape = _resolve_shape(x.size, self.shape)
        return _view_impl(x, out_shape=out_shape, force_copy=self.force_copy)


if __name__ == "__main__":
    key = jax.random.PRNGKey(0)
    key_x, key_z = jax.random.split(key)

    # Typical WGAN-GP usage: flatten NCHW conv features before the linear head.
    B, C, H, W = 2, 4, 16, 16
    x = jax.random.normal(key_x, (B, C, H, W), dtype=jnp.float32)

    # 1) Pallas copy path (aligned case: no padding, tiled lane-dense slab).
    view = View((-1, C * H * W))
    y = jax.block_until_ready(view(x))
    ref = x.reshape(B, C * H * W)
    assert y.shape == (B, C * H * W), y.shape
    assert y.dtype == x.dtype
    assert bool(jnp.all(y == ref))

    # 2) Zero-copy metadata path (recommended production path).
    y0 = jax.block_until_ready(View((-1, C * H * W), force_copy=False)(x))
    assert bool(jnp.all(y0 == ref))

    # 3) Awkward size: numel not a multiple of 128 -> padded tiled path with
    #    input_output_aliases on the padded temporary, tail sliced off.
    z = jax.random.normal(key_z, (3, 5, 7), dtype=jnp.float32)
    vz = jax.block_until_ready(View((5, 21))(z))
    assert vz.shape == (5, 21)
    assert bool(jnp.all(vz == z.reshape(5, 21)))

    print("KERNEL_OK")
</pallas_src>

<mosaic_0001>
module attributes {stable_mosaic.version = 11 : i64} {
  func.func @_copy_kernel(%arg0: i32, %arg1: memref<8x256xf32, #tpu.memory_space<vmem>>, %arg2: memref<8x256xf32, #tpu.memory_space<vmem>>) attributes {dimension_semantics = [#tpu.dimension_semantics<parallel>], iteration_bounds = array<i64: 1>, scalar_prefetch = 0 : i64, scratch_operands = 0 : i64, tpu.core_type = #tpu.core_type<tc>, window_params = [{transform_indices = @transform_0, window_bounds = array<i64: 8, 256>}, {transform_indices = @transform_1, window_bounds = array<i64: 8, 256>}]} {
    %c0 = arith.constant 0 : index
    %c0_0 = arith.constant 0 : index
    %0 = vector.load %arg1[%c0, %c0_0] : memref<8x256xf32, #tpu.memory_space<vmem>>, vector<8x256xf32>
    %c0_1 = arith.constant 0 : index
    %c0_2 = arith.constant 0 : index
    %1 = vector.load %arg2[%c0_1, %c0_2] : memref<8x256xf32, #tpu.memory_space<vmem>>, vector<8x256xf32>
    tpu.vector_store %arg2[%c0_1, %c0_2], %0 {strides = array<i32>} : memref<8x256xf32, #tpu.memory_space<vmem>>, vector<8x256xf32>,
    return
  }
  func.func @transform_0(%arg0: i32) -> (i32, i32) {
    %c0_i32 = arith.constant 0 : i32
    %c0_i32_0 = arith.constant 0 : i32
    return %arg0, %c0_i32 : i32, i32
  }
  func.func @transform_1(%arg0: i32) -> (i32, i32) {
    %c0_i32 = arith.constant 0 : i32
    %c0_i32_0 = arith.constant 0 : i32
    return %arg0, %c0_i32 : i32, i32
  }
}

</mosaic_0001>

<llo_original>
// kernel: _view_impl.1
$region0: #{_view_impl.1}
  #allocation0 [shape = 'u32[]', space=smem, size = 0x4, offset = 0x4, fixed_abs, tag = 'smem constant byte address 0x4 - core index']
  #allocation1 [shape = 'u32[144,128]{1,0:T(1,128)}', space=vmem, size = 0x12000, scoped, tag = 'internal scratch']
  %s0 = inlined_call_operand.vmem [shape: f32[8,256], index: 0, kind: input, shape index: {}]
  %s1 = inlined_call_operand.vmem [shape: f32[8,256], index: 1, kind: output, shape index: {}]
  %s2 = sld [smem:[#allocation0]]
  $region14: #{_view_impl.1} parent=0
    _
  %s4 = ssub.s32 1, %s2
  %s5 = scalar_select 0, %s4, %s2
  // Predicated region
  $region2: #{_view_impl.1} parent=0 // pred_check
    _
  $region3: #{_view_impl.1} parent=0 // pred_check_branch
    %7 = sbr.rel (0) target = $region5
  $region4: #{_view_impl.1} parent=0 // pred_region
    _
  $region5: #{_view_impl.1} parent=0 // pred_fallthru
    _
  %v8 = vld [vmem:[%s0] sm:$0xff]
  %v9 = vld [vmem:[%s0 + $0x8] sm:$0xff]
  %10 = vst [vmem:[%s1] sm:$0xff] %v8
  %11 = vst [vmem:[%s1 + $0x8] sm:$0xff] %v9
  // Predicated region
  $region6: #{_view_impl.1} parent=0 // pred_check
    _
  $region7: #{_view_impl.1} parent=0 // pred_check_branch
    %13 = sbr.rel (0) target = $region9
  $region8: #{_view_impl.1} parent=0 // pred_region
    _
  $region9: #{_view_impl.1} parent=0 // pred_fallthru
    _
  // Predicated region
  $region10: #{_view_impl.1} parent=0 // pred_check
    _
  $region11: #{_view_impl.1} parent=0 // pred_check_branch
    %15 = sbr.rel (0) target = $region13
  $region12: #{_view_impl.1} parent=0 // pred_region
    _
  $region13: #{_view_impl.1} parent=0 // pred_fallthru
    _

</llo_original>
